<compile_context>
chip_gen: v7x
topology: tpu7x:2x2x1
jax: 0.10.0
libtpu: 0.0.40
codegen_flags: <defaults>
</compile_context>

<pallas_src>
import jax
import jax.numpy as jnp
from jax.experimental import pallas as pl
from jax.experimental.pallas import tpu as pltpu


# ----------------------------------------------------------------------------
# Kernels
# ----------------------------------------------------------------------------
def _q_tail(h0_pre, b0_ref, w1_ref, b1_ref, w2_ref, b2_ref, o_ref):
    """Layers 1..2, shared by both layer-0 variants.  h0_pre is f32 (tb, h0)."""
    h0 = jnp.maximum(h0_pre + b0_ref[...], 0.0)
    # Layer 1: bf16 MXU matmul, f32 accumulation.
    h1 = jnp.dot(h0.astype(jnp.bfloat16), w1_ref[...],
                 preferred_element_type=jnp.float32)
    h1 = jnp.maximum(h1 + b1_ref[...], 0.0)
    # Layer 2 (h1 -> 1): VPU multiply + lane reduce instead of an N=1 MXU pass.
    q = jnp.sum(h1 * w2_ref[...], axis=-1, keepdims=True)        # (tb, 1) f32
    o_ref[...] = (q + b2_ref[0, 0]).astype(o_ref.dtype)


def _qfunc_kernel_fused(obs_ref, act_ref, w0_ref, b0_ref, w1_ref, b1_ref,
                        w2_ref, b2_ref, o_ref):
    # In-register lane concat (f32 layout is the best-supported concat path),
    # then ONE bf16 MXU push stream for layer 0 against the unsplit W0.
    x = jnp.concatenate([obs_ref[...].astype(jnp.float32),
                         act_ref[...].astype(jnp.float32)], axis=-1)
    h0_pre = jnp.dot(x.astype(jnp.bfloat16), w0_ref[...],
                     preferred_element_type=jnp.float32)
    _q_tail(h0_pre, b0_ref, w1_ref, b1_ref, w2_ref, b2_ref, o_ref)


def _qfunc_kernel_split(obs_ref, act_ref, w0o_ref, w0a_ref, b0_ref, w1_ref,
                        b1_ref, w2_ref, b2_ref, o_ref):
    # Fallback layer 0: fused concat via split W0 (two push streams, still bf16).
    h0_pre = jnp.dot(obs_ref[...].astype(jnp.bfloat16), w0o_ref[...],
                     preferred_element_type=jnp.float32)
    h0_pre = h0_pre + jnp.dot(act_ref[...].astype(jnp.bfloat16), w0a_ref[...],
                              preferred_element_type=jnp.float32)
    _q_tail(h0_pre, b0_ref, w1_ref, b1_ref, w2_ref, b2_ref, o_ref)


# ----------------------------------------------------------------------------
# Wrapper
# ----------------------------------------------------------------------------
def _round_up(n, m):
    return ((n + m - 1) // m) * m


def _pick_batch_tile(B, block_b):
    """Sublane-aligned batch tile; keep >=2 grid steps when possible (v7x)."""
    if B > block_b:
        return max(8, (block_b // 8) * 8)
    half = _round_up(pl.cdiv(B, 2), 8)
    return half if half < B else B


def mlp_q_function(obs, act, params, *, block_b=2048, fuse_layer0=True):
    """Pallas forward pass. Returns q of shape (B,), like torch.squeeze(q, -1)."""
    w0, b0, w1, b1, w2, b2 = params
    B, obs_dim = obs.shape
    act_dim = act.shape[-1]
    h0 = w0.shape[1]
    h1 = w1.shape[1]

    # Tiny weight-side prep: bf16 weights for the MXU, f32 biases, last layer as
    # a row vector for the VPU path, scalar final bias for SMEM.
    w0_bf = w0.astype(jnp.bfloat16)                   # (obs_dim+act_dim, h0)
    w1_bf = w1.astype(jnp.bfloat16)                   # (h0, h1)
    b0_r = b0.reshape(1, h0).astype(jnp.float32)
    b1_r = b1.reshape(1, h1).astype(jnp.float32)
    w2_row = w2.reshape(1, h1).astype(jnp.float32)
    b2_s = b2.reshape(1, 1).astype(jnp.float32)

    tb = _pick_batch_tile(B, block_b)
    grid = (pl.cdiv(B, tb),)

    batch_spec = lambda d: pl.BlockSpec((tb, d), lambda i: (i, 0))
    const_spec = lambda a: pl.BlockSpec(a.shape, lambda i: (0, 0))
    common_ops = (b0_r, w1_bf, b1_r, w2_row)

    def run(kernel, layer0_ops):
        return pl.pallas_call(
            kernel,
            out_shape=jax.ShapeDtypeStruct((B, 1), jnp.float32),
            grid=grid,
            in_specs=[batch_spec(obs_dim),                         # obs tile
                      batch_spec(act_dim),                         # act tile
                      *[const_spec(a) for a in layer0_ops],        # W0 (resident)
                      *[const_spec(a) for a in common_ops],        # b0,W1,b1,w2
                      pl.BlockSpec(memory_space=pltpu.MemorySpace.SMEM)],  # b2
            out_specs=pl.BlockSpec((tb, 1), lambda i: (i, 0)),
            compiler_params=pltpu.CompilerParams(
                dimension_semantics=("parallel",),
                vmem_limit_bytes=32 * 1024 * 1024),
        )(obs, act, *layer0_ops, *common_ops, b2_s)

    if fuse_layer0:
        try:
            out = run(_qfunc_kernel_fused, (w0_bf,))
            jax.block_until_ready(out)   # surface any deferred compile issue here
        except Exception:
            # Feature-detect fallback: Mosaic builds without unaligned
            # lane-concat support use the split-W0 kernel (same math, two dots).
            out = run(_qfunc_kernel_split, (w0_bf[:obs_dim], w0_bf[obs_dim:]))
    else:
        out = run(_qfunc_kernel_split, (w0_bf[:obs_dim], w0_bf[obs_dim:]))
    return jnp.squeeze(out, axis=-1)


# ----------------------------------------------------------------------------
# Params / reference
# ----------------------------------------------------------------------------
def init_params(key, obs_dim, act_dim, hidden_sizes):
    """Deterministic PyTorch-nn.Linear-style (uniform +-1/sqrt(fan_in)) init."""
    sizes = [obs_dim + act_dim] + list(hidden_sizes) + [1]
    params = []
    for j in range(len(sizes) - 1):
        fan_in, fan_out = sizes[j], sizes[j + 1]
        key, kw, kb = jax.random.split(key, 3)
        bound = 1.0 / jnp.sqrt(jnp.float32(fan_in))
        # weight stored (in, out) so the kernel does x @ W directly
        w = jax.random.uniform(kw, (fan_in, fan_out), jnp.float32, -bound, bound)
        b = jax.random.uniform(kb, (1, fan_out), jnp.float32, -bound, bound)
        params += [w, b]
    return tuple(params)


def _reference(obs, act, params):
    """Plain-JAX f32 reference for correctness checking."""
    x = jnp.concatenate([obs, act], axis=-1)
    w0, b0, w1, b1, w2, b2 = params
    h = jnp.maximum(x @ w0 + b0, 0.0)
    h = jnp.maximum(h @ w1 + b1, 0.0)
    q = h @ w2 + b2
    return jnp.squeeze(q, axis=-1)


if __name__ == "__main__":
    obs_dim, act_dim = 11, 5
    hidden_sizes = (32, 32)

    key = jax.random.PRNGKey(0)
    k_obs, k_act, k_params, k_obs2, k_act2 = jax.random.split(key, 5)
    params = init_params(k_params, obs_dim, act_dim, hidden_sizes)

    # Small batch: single tile, grid = (1,).
    batch = 8
    obs = jax.random.normal(k_obs, (batch, obs_dim), jnp.float32)
    act = jax.random.normal(k_act, (batch, act_dim), jnp.float32)
    q = mlp_q_function(obs, act, params)
    jax.block_until_ready(q)
    q_ref = _reference(obs, act, params)
    assert q.shape == (batch,), q.shape
    # bf16 matmuls with f32 accumulation: loose-but-comfortable tolerance.
    assert jnp.allclose(q, q_ref, atol=2e-2, rtol=2e-2), "mismatch (B=8)"

    # Multi-tile batch with a partial trailing block (exercises the grid path).
    batch2 = 300
    obs2 = jax.random.normal(k_obs2, (batch2, obs_dim), jnp.float32)
    act2 = jax.random.normal(k_act2, (batch2, act_dim), jnp.float32)
    q2 = mlp_q_function(obs2, act2, params, block_b=128)
    jax.block_until_ready(q2)
    q2_ref = _reference(obs2, act2, params)
    assert q2.shape == (batch2,), q2.shape
    assert jnp.allclose(q2, q2_ref, atol=2e-2, rtol=2e-2), "mismatch (B=300)"

    print("KERNEL_OK")
</pallas_src>

<mosaic_0001>
module attributes {stable_mosaic.version = 11 : i64} {
  func.func @_qfunc_kernel_fused(%arg0: i32, %arg1: memref<8x11xf32, #tpu.memory_space<vmem>>, %arg2: memref<8x5xf32, #tpu.memory_space<vmem>>, %arg3: memref<16x32xbf16, #tpu.memory_space<vmem>>, %arg4: memref<1x32xf32, #tpu.memory_space<vmem>>, %arg5: memref<32x32xbf16, #tpu.memory_space<vmem>>, %arg6: memref<1x32xf32, #tpu.memory_space<vmem>>, %arg7: memref<1x32xf32, #tpu.memory_space<vmem>>, %arg8: memref<1x1xf32, #tpu.memory_space<smem>>, %arg9: memref<8x1xf32, #tpu.memory_space<vmem>>) attributes {dimension_semantics = [#tpu.dimension_semantics<parallel>], iteration_bounds = array<i64: 1>, scalar_prefetch = 0 : i64, scratch_operands = 0 : i64, tpu.core_type = #tpu.core_type<tc>, window_params = [{transform_indices = @transform_0, window_bounds = array<i64: 8, 11>}, {transform_indices = @transform_1, window_bounds = array<i64: 8, 5>}, {pipeline_mode = #tpu.pipeline_mode<synchronous>, transform_indices = @transform_2, window_bounds = array<i64: 16, 32>}, {pipeline_mode = #tpu.pipeline_mode<synchronous>, transform_indices = @transform_3, window_bounds = array<i64: 1, 32>}, {pipeline_mode = #tpu.pipeline_mode<synchronous>, transform_indices = @transform_4, window_bounds = array<i64: 32, 32>}, {pipeline_mode = #tpu.pipeline_mode<synchronous>, transform_indices = @transform_5, window_bounds = array<i64: 1, 32>}, {pipeline_mode = #tpu.pipeline_mode<synchronous>, transform_indices = @transform_6, window_bounds = array<i64: 1, 32>}, {transform_indices = @transform_7, window_bounds = array<i64: 1, 1>}, {transform_indices = @transform_8, window_bounds = array<i64: 8, 1>}]} {
    %c0 = arith.constant 0 : index
    %c0_0 = arith.constant 0 : index
    %0 = vector.load %arg1[%c0, %c0_0] : memref<8x11xf32, #tpu.memory_space<vmem>>, vector<8x11xf32>
    %c0_1 = arith.constant 0 : index
    %c0_2 = arith.constant 0 : index
    %1 = vector.load %arg2[%c0_1, %c0_2] : memref<8x5xf32, #tpu.memory_space<vmem>>, vector<8x5xf32>
    %2 = tpu.concatenate %0, %1 in 1 : vector<8x11xf32>, vector<8x5xf32> -> vector<8x16xf32>
    %3 = arith.truncf %2 : vector<8x16xf32> to vector<8x16xbf16>
    %c0_3 = arith.constant 0 : index
    %c0_4 = arith.constant 0 : index
    %4 = vector.load %arg3[%c0_3, %c0_4] : memref<16x32xbf16, #tpu.memory_space<vmem>>, vector<16x32xbf16>
    %cst = arith.constant dense<0.000000e+00> : vector<8x32xf32>
    %5 = tpu.matmul %3, %4, %cst {dimension_numbers = #tpu.dot_dimension_numbers<[1], [0], [0], [1], [0, 0, 1, 1], [], []>} : vector<8x16xbf16>, vector<16x32xbf16>, vector<8x32xf32> -> vector<8x32xf32>
    %c0_5 = arith.constant 0 : index
    %c0_6 = arith.constant 0 : index
    %6 = vector.load %arg4[%c0_5, %c0_6] : memref<1x32xf32, #tpu.memory_space<vmem>>, vector<1x32xf32>
    %7 = vector.broadcast %6 : vector<1x32xf32> to vector<8x32xf32>
    %8 = arith.addf %5, %7 : vector<8x32xf32>
    %cst_7 = arith.constant 0.000000e+00 : f32
    %9 = vector.broadcast %cst_7 : f32 to vector<8x32xf32>
    %10 = arith.maximumf %8, %9 : vector<8x32xf32>
    %11 = arith.truncf %10 : vector<8x32xf32> to vector<8x32xbf16>
    %c0_8 = arith.constant 0 : index
    %c0_9 = arith.constant 0 : index
    %12 = vector.load %arg5[%c0_8, %c0_9] : memref<32x32xbf16, #tpu.memory_space<vmem>>, vector<32x32xbf16>
    %cst_10 = arith.constant dense<0.000000e+00> : vector<8x32xf32>
    %13 = tpu.matmul %11, %12, %cst_10 {dimension_numbers = #tpu.dot_dimension_numbers<[1], [0], [0], [1], [0, 0, 1, 1], [], []>} : vector<8x32xbf16>, vector<32x32xbf16>, vector<8x32xf32> -> vector<8x32xf32>
    %c0_11 = arith.constant 0 : index
    %c0_12 = arith.constant 0 : index
    %14 = vector.load %arg6[%c0_11, %c0_12] : memref<1x32xf32, #tpu.memory_space<vmem>>, vector<1x32xf32>
    %15 = vector.broadcast %14 : vector<1x32xf32> to vector<8x32xf32>
    %16 = arith.addf %13, %15 : vector<8x32xf32>
    %cst_13 = arith.constant 0.000000e+00 : f32
    %17 = vector.broadcast %cst_13 : f32 to vector<8x32xf32>
    %18 = arith.maximumf %16, %17 : vector<8x32xf32>
    %c0_14 = arith.constant 0 : index
    %c0_15 = arith.constant 0 : index
    %19 = vector.load %arg7[%c0_14, %c0_15] : memref<1x32xf32, #tpu.memory_space<vmem>>, vector<1x32xf32>
    %20 = vector.broadcast %19 : vector<1x32xf32> to vector<8x32xf32>
    %21 = arith.mulf %18, %20 : vector<8x32xf32>
    %cst_16 = arith.constant dense<0.000000e+00> : vector<8xf32>
    %22 = vector.multi_reduction <add>, %21, %cst_16 [1] : vector<8x32xf32> to vector<8xf32>
    %23 = vector.shape_cast %22 : vector<8xf32> to vector<8x1xf32>
    %c0_17 = arith.constant 0 : index
    %c0_18 = arith.constant 0 : index
    %24 = memref.load %arg8[%c0_17, %c0_18] : memref<1x1xf32, #tpu.memory_space<smem>>
    %25 = vector.broadcast %24 : f32 to vector<8x1xf32>
    %26 = arith.addf %23, %25 : vector<8x1xf32>
    %c0_19 = arith.constant 0 : index
    %c0_20 = arith.constant 0 : index
    %27 = vector.load %arg9[%c0_19, %c0_20] : memref<8x1xf32, #tpu.memory_space<vmem>>, vector<8x1xf32>
    tpu.vector_store %arg9[%c0_19, %c0_20], %26 {strides = array<i32>} : memref<8x1xf32, #tpu.memory_space<vmem>>, vector<8x1xf32>,
    return
  }
  func.func @transform_0(%arg0: i32) -> (i32, i32) {
    %c0_i32 = arith.constant 0 : i32
    %c0_i32_0 = arith.constant 0 : i32
    return %arg0, %c0_i32 : i32, i32
  }
  func.func @transform_1(%arg0: i32) -> (i32, i32) {
    %c0_i32 = arith.constant 0 : i32
    %c0_i32_0 = arith.constant 0 : i32
    return %arg0, %c0_i32 : i32, i32
  }
  func.func @transform_2(%arg0: i32) -> (i32, i32) {
    %c0_i32 = arith.constant 0 : i32
    %c0_i32_0 = arith.constant 0 : i32
    %c0_i32_1 = arith.constant 0 : i32
    return %c0_i32, %c0_i32_0 : i32, i32
  }
  func.func @transform_3(%arg0: i32) -> (i32, i32) {
    %c0_i32 = arith.constant 0 : i32
    %c0_i32_0 = arith.constant 0 : i32
    %c0_i32_1 = arith.constant 0 : i32
    return %c0_i32, %c0_i32_0 : i32, i32
  }
  func.func @transform_4(%arg0: i32) -> (i32, i32) {
    %c0_i32 = arith.constant 0 : i32
    %c0_i32_0 = arith.constant 0 : i32
    %c0_i32_1 = arith.constant 0 : i32
    return %c0_i32, %c0_i32_0 : i32, i32
  }
  func.func @transform_5(%arg0: i32) -> (i32, i32) {
    %c0_i32 = arith.constant 0 : i32
    %c0_i32_0 = arith.constant 0 : i32
    %c0_i32_1 = arith.constant 0 : i32
    return %c0_i32, %c0_i32_0 : i32, i32
  }
  func.func @transform_6(%arg0: i32) -> (i32, i32) {
    %c0_i32 = arith.constant 0 : i32
    %c0_i32_0 = arith.constant 0 : i32
    %c0_i32_1 = arith.constant 0 : i32
    return %c0_i32, %c0_i32_0 : i32, i32
  }
  func.func @transform_7(%arg0: i32) -> (i32, i32) {
    %c0_i32 = arith.constant 0 : i32
    %c0_i32_0 = arith.constant 0 : i32
    %c0_i32_1 = arith.constant 0 : i32
    return %c0_i32, %c0_i32_0 : i32, i32
  }
  func.func @transform_8(%arg0: i32) -> (i32, i32) {
    %c0_i32 = arith.constant 0 : i32
    %c0_i32_0 = arith.constant 0 : i32
    return %arg0, %c0_i32 : i32, i32
  }
}

module attributes {stable_mosaic.version = 11 : i64} {
  func.func @_qfunc_kernel_split(%arg0: i32, %arg1: memref<8x11xf32, #tpu.memory_space<vmem>>, %arg2: memref<8x5xf32, #tpu.memory_space<vmem>>, %arg3: memref<11x32xbf16, #tpu.memory_space<vmem>>, %arg4: memref<5x32xbf16, #tpu.memory_space<vmem>>, %arg5: memref<1x32xf32, #tpu.memory_space<vmem>>, %arg6: memref<32x32xbf16, #tpu.memory_space<vmem>>, %arg7: memref<1x32xf32, #tpu.memory_space<vmem>>, %arg8: memref<1x32xf32, #tpu.memory_space<vmem>>, %arg9: memref<1x1xf32, #tpu.memory_space<smem>>, %arg10: memref<8x1xf32, #tpu.memory_space<vmem>>) attributes {dimension_semantics = [#tpu.dimension_semantics<parallel>], iteration_bounds = array<i64: 1>, scalar_prefetch = 0 : i64, scratch_operands = 0 : i64, tpu.core_type = #tpu.core_type<tc>, window_params = [{transform_indices = @transform_0, window_bounds = array<i64: 8, 11>}, {transform_indices = @transform_1, window_bounds = array<i64: 8, 5>}, {pipeline_mode = #tpu.pipeline_mode<synchronous>, transform_indices = @transform_2, window_bounds = array<i64: 11, 32>}, {pipeline_mode = #tpu.pipeline_mode<synchronous>, transform_indices = @transform_3, window_bounds = array<i64: 5, 32>}, {pipeline_mode = #tpu.pipeline_mode<synchronous>, transform_indices = @transform_4, window_bounds = array<i64: 1, 32>}, {pipeline_mode = #tpu.pipeline_mode<synchronous>, transform_indices = @transform_5, window_bounds = array<i64: 32, 32>}, {pipeline_mode = #tpu.pipeline_mode<synchronous>, transform_indices = @transform_6, window_bounds = array<i64: 1, 32>}, {pipeline_mode = #tpu.pipeline_mode<synchronous>, transform_indices = @transform_7, window_bounds = array<i64: 1, 32>}, {transform_indices = @transform_8, window_bounds = array<i64: 1, 1>}, {transform_indices = @transform_9, window_bounds = array<i64: 8, 1>}]} {
    %c0 = arith.constant 0 : index
    %c0_0 = arith.constant 0 : index
    %0 = vector.load %arg1[%c0, %c0_0] : memref<8x11xf32, #tpu.memory_space<vmem>>, vector<8x11xf32>
    %1 = arith.truncf %0 : vector<8x11xf32> to vector<8x11xbf16>
    %c0_1 = arith.constant 0 : index
    %c0_2 = arith.constant 0 : index
    %2 = vector.load %arg3[%c0_1, %c0_2] : memref<11x32xbf16, #tpu.memory_space<vmem>>, vector<11x32xbf16>
    %cst = arith.constant dense<0.000000e+00> : vector<8x32xf32>
    %3 = tpu.matmul %1, %2, %cst {dimension_numbers = #tpu.dot_dimension_numbers<[1], [0], [0], [1], [0, 0, 1, 1], [], []>} : vector<8x11xbf16>, vector<11x32xbf16>, vector<8x32xf32> -> vector<8x32xf32>
    %c0_3 = arith.constant 0 : index
    %c0_4 = arith.constant 0 : index
    %4 = vector.load %arg2[%c0_3, %c0_4] : memref<8x5xf32, #tpu.memory_space<vmem>>, vector<8x5xf32>
    %5 = arith.truncf %4 : vector<8x5xf32> to vector<8x5xbf16>
    %c0_5 = arith.constant 0 : index
    %c0_6 = arith.constant 0 : index
    %6 = vector.load %arg4[%c0_5, %c0_6] : memref<5x32xbf16, #tpu.memory_space<vmem>>, vector<5x32xbf16>
    %cst_7 = arith.constant dense<0.000000e+00> : vector<8x32xf32>
    %7 = tpu.matmul %5, %6, %cst_7 {dimension_numbers = #tpu.dot_dimension_numbers<[1], [0], [0], [1], [0, 0, 1, 1], [], []>} : vector<8x5xbf16>, vector<5x32xbf16>, vector<8x32xf32> -> vector<8x32xf32>
    %8 = arith.addf %3, %7 : vector<8x32xf32>
    %c0_8 = arith.constant 0 : index
    %c0_9 = arith.constant 0 : index
    %9 = vector.load %arg5[%c0_8, %c0_9] : memref<1x32xf32, #tpu.memory_space<vmem>>, vector<1x32xf32>
    %10 = vector.broadcast %9 : vector<1x32xf32> to vector<8x32xf32>
    %11 = arith.addf %8, %10 : vector<8x32xf32>
    %cst_10 = arith.constant 0.000000e+00 : f32
    %12 = vector.broadcast %cst_10 : f32 to vector<8x32xf32>
    %13 = arith.maximumf %11, %12 : vector<8x32xf32>
    %14 = arith.truncf %13 : vector<8x32xf32> to vector<8x32xbf16>
    %c0_11 = arith.constant 0 : index
    %c0_12 = arith.constant 0 : index
    %15 = vector.load %arg6[%c0_11, %c0_12] : memref<32x32xbf16, #tpu.memory_space<vmem>>, vector<32x32xbf16>
    %cst_13 = arith.constant dense<0.000000e+00> : vector<8x32xf32>
    %16 = tpu.matmul %14, %15, %cst_13 {dimension_numbers = #tpu.dot_dimension_numbers<[1], [0], [0], [1], [0, 0, 1, 1], [], []>} : vector<8x32xbf16>, vector<32x32xbf16>, vector<8x32xf32> -> vector<8x32xf32>
    %c0_14 = arith.constant 0 : index
    %c0_15 = arith.constant 0 : index
    %17 = vector.load %arg7[%c0_14, %c0_15] : memref<1x32xf32, #tpu.memory_space<vmem>>, vector<1x32xf32>
    %18 = vector.broadcast %17 : vector<1x32xf32> to vector<8x32xf32>
    %19 = arith.addf %16, %18 : vector<8x32xf32>
    %cst_16 = arith.constant 0.000000e+00 : f32
    %20 = vector.broadcast %cst_16 : f32 to vector<8x32xf32>
    %21 = arith.maximumf %19, %20 : vector<8x32xf32>
    %c0_17 = arith.constant 0 : index
    %c0_18 = arith.constant 0 : index
    %22 = vector.load %arg8[%c0_17, %c0_18] : memref<1x32xf32, #tpu.memory_space<vmem>>, vector<1x32xf32>
    %23 = vector.broadcast %22 : vector<1x32xf32> to vector<8x32xf32>
    %24 = arith.mulf %21, %23 : vector<8x32xf32>
    %cst_19 = arith.constant dense<0.000000e+00> : vector<8xf32>
    %25 = vector.multi_reduction <add>, %24, %cst_19 [1] : vector<8x32xf32> to vector<8xf32>
    %26 = vector.shape_cast %25 : vector<8xf32> to vector<8x1xf32>
    %c0_20 = arith.constant 0 : index
    %c0_21 = arith.constant 0 : index
    %27 = memref.load %arg9[%c0_20, %c0_21] : memref<1x1xf32, #tpu.memory_space<smem>>
    %28 = vector.broadcast %27 : f32 to vector<8x1xf32>
    %29 = arith.addf %26, %28 : vector<8x1xf32>
    %c0_22 = arith.constant 0 : index
    %c0_23 = arith.constant 0 : index
    %30 = vector.load %arg10[%c0_22, %c0_23] : memref<8x1xf32, #tpu.memory_space<vmem>>, vector<8x1xf32>
    tpu.vector_store %arg10[%c0_22, %c0_23], %29 {strides = array<i32>} : memref<8x1xf32, #tpu.memory_space<vmem>>, vector<8x1xf32>,
    return
  }
  func.func @transform_0(%arg0: i32) -> (i32, i32) {
    %c0_i32 = arith.constant 0 : i32
    %c0_i32_0 = arith.constant 0 : i32
    return %arg0, %c0_i32 : i32, i32
  }
  func.func @transform_1(%arg0: i32) -> (i32, i32) {
    %c0_i32 = arith.constant 0 : i32
    %c0_i32_0 = arith.constant 0 : i32
    return %arg0, %c0_i32 : i32, i32
  }
  func.func @transform_2(%arg0: i32) -> (i32, i32) {
    %c0_i32 = arith.constant 0 : i32
    %c0_i32_0 = arith.constant 0 : i32
    %c0_i32_1 = arith.constant 0 : i32
    return %c0_i32, %c0_i32_0 : i32, i32
  }
  func.func @transform_3(%arg0: i32) -> (i32, i32) {
    %c0_i32 = arith.constant 0 : i32
    %c0_i32_0 = arith.constant 0 : i32
    %c0_i32_1 = arith.constant 0 : i32
    return %c0_i32, %c0_i32_0 : i32, i32
  }
  func.func @transform_4(%arg0: i32) -> (i32, i32) {
    %c0_i32 = arith.constant 0 : i32
    %c0_i32_0 = arith.constant 0 : i32
    %c0_i32_1 = arith.constant 0 : i32
    return %c0_i32, %c0_i32_0 : i32, i32
  }
  func.func @transform_5(%arg0: i32) -> (i32, i32) {
    %c0_i32 = arith.constant 0 : i32
    %c0_i32_0 = arith.constant 0 : i32
    %c0_i32_1 = arith.constant 0 : i32
    return %c0_i32, %c0_i32_0 : i32, i32
  }
  func.func @transform_6(%arg0: i32) -> (i32, i32) {
    %c0_i32 = arith.constant 0 : i32
    %c0_i32_0 = arith.constant 0 : i32
    %c0_i32_1 = arith.constant 0 : i32
    return %c0_i32, %c0_i32_0 : i32, i32
  }
  func.func @transform_7(%arg0: i32) -> (i32, i32) {
    %c0_i32 = arith.constant 0 : i32
    %c0_i32_0 = arith.constant 0 : i32
    %c0_i32_1 = arith.constant 0 : i32
    return %c0_i32, %c0_i32_0 : i32, i32
  }
  func.func @transform_8(%arg0: i32) -> (i32, i32) {
    %c0_i32 = arith.constant 0 : i32
    %c0_i32_0 = arith.constant 0 : i32
    %c0_i32_1 = arith.constant 0 : i32
    return %c0_i32, %c0_i32_0 : i32, i32
  }
  func.func @transform_9(%arg0: i32) -> (i32, i32) {
    %c0_i32 = arith.constant 0 : i32
    %c0_i32_0 = arith.constant 0 : i32
    return %arg0, %c0_i32 : i32, i32
  }
}

</mosaic_0001>

<llo_original>
// kernel: tpu_custom_call.1
$region0: #{tpu_custom_call.1}
  #allocation0 [shape = 'u32[]', space=smem, size = 0x4, offset = 0x4, fixed_abs, tag = 'smem constant byte address 0x4 - core index']
  #allocation1 [shape = 'u32[144,128]{1,0:T(1,128)}', space=vmem, size = 0x12000, scoped, tag = 'internal scratch']
  #allocation2 [shape = 'f32[1,1]{1,0:T(1,128)S(6)}', space=smem, size = 0x200, scoped, tag = 'scoped memory for tpu_custom_call.1']
  %s0 = inlined_call_operand.hbm [shape: f32[8,11], index: 0, kind: input, shape index: {}]
  %s1 = inlined_call_operand.hbm [shape: f32[8,5], index: 1, kind: input, shape index: {}]
  %s2 = inlined_call_operand.hbm [shape: bf16[16,32], index: 2, kind: input, shape index: {}]
  %s3 = inlined_call_operand.vmem [shape: f32[1,32], index: 3, kind: input, shape index: {}]
  %s4 = inlined_call_operand.vmem [shape: bf16[32,32], index: 4, kind: input, shape index: {}]
  %s5 = inlined_call_operand.vmem [shape: f32[1,32], index: 5, kind: input, shape index: {}]
  %s6 = inlined_call_operand.vmem [shape: f32[1,32], index: 6, kind: input, shape index: {}]
  %s7 = inlined_call_operand.<no memory space> [shape: f32[1,1], index: 7, kind: input, shape index: {}]
  %s8 = inlined_call_operand.vmem [shape: f32[8,1], index: 8, kind: output, shape index: {}]
  %s9 = sld [smem:[#allocation0]]
  $region54: #{tpu_custom_call.1} parent=0
    _
  %s11 = ssub.s32 1, %s9
  %s12 = scalar_select 0, %s11, %s9
  %13 = sst [smem:[#allocation2]] %s7
  $region1: #{tpu_custom_call.1} parent=0
    #allocation3 [shape = 'u8[4096]{0}', space=vmem, size = 0x1000, scoped, tag = 'input window, operand 0, single buffered']
    #allocation4 [shape = 's32[1]{0}', space=sflag, size = 0x4, scoped, tag = 'scoped memory for tpu_custom_call.1']
    #allocation5 [shape = 'u8[4096]{0}', space=vmem, size = 0x1000, scoped, tag = 'input window, operand 1, single buffered']
    #allocation6 [shape = 's32[1]{0}', space=sflag, size = 0x4, scoped, tag = 'scoped memory for tpu_custom_call.1']
    #allocation7 [shape = 'u8[4096]{0}', space=vmem, size = 0x1000, scoped, tag = 'input window, operand 2, single buffered']
    %14 = vsyncpa [#allocation4], 0
    %15 = vsyncpa [#allocation6], 0
    // Predicated region
    $region2: #{tpu_custom_call.1} parent=1 // pred_check
      _
    $region3: #{tpu_custom_call.1} parent=1 // pred_check_branch
      %17 = sbr.rel (0) target = $region5
    $region4: #{tpu_custom_call.1} parent=1 // pred_region
      %s19 = ssub.s32 128, 128
      %20 = vsyncadd [#allocation4], %s19
      %s22 = sshll.u32 [#allocation3], 4
      %s23 = int_to_ptr.vmem [resolvable:$true] %s22
      %25 = dma.hbm_to_vmem [thread:$0]  %s0, 128, %s23, [#allocation4]
    $region5: #{tpu_custom_call.1} parent=1 // pred_fallthru
      _
    // Predicated region
    $region6: #{tpu_custom_call.1} parent=1 // pred_check
      _
    $region7: #{tpu_custom_call.1} parent=1 // pred_check_branch
      %27 = sbr.rel (0) target = $region9
    $region8: #{tpu_custom_call.1} parent=1 // pred_region
      %s29 = ssub.s32 128, 128
      %30 = vsyncadd [#allocation6], %s29
      %s32 = sshll.u32 [#allocation5], 4
      %s33 = int_to_ptr.vmem [resolvable:$true] %s32
      %35 = dma.hbm_to_vmem [thread:$0]  %s1, 128, %s33, [#allocation6]
    $region9: #{tpu_custom_call.1} parent=1 // pred_fallthru
      _
    // Predicated region
    $region10: #{tpu_custom_call.1} parent=1 // pred_check
      _
    $region11: #{tpu_custom_call.1} parent=1 // pred_check_branch
      %37 = sbr.rel (0) target = $region13
    $region12: #{tpu_custom_call.1} parent=1 // pred_region
      %s39 = ssub.s32 128, 128
      %40 = vsyncadd [#allocation6], %s39
      %s41 = sshll.u32 [#allocation7], 4
      %s42 = int_to_ptr.vmem [resolvable:$true] %s41
      %47 = dma.hbm_to_vmem [thread:$0]  %s2, 128, %s42, [#allocation6], 64, 64, 4
    $region13: #{tpu_custom_call.1} parent=1 // pred_fallthru
      _
    // Predicated region
    $region14: #{tpu_custom_call.1} parent=1 // pred_check
      _
    $region15: #{tpu_custom_call.1} parent=1 // pred_check_branch
      %49 = sbr.rel (0) target = $region17
    $region16: #{tpu_custom_call.1} parent=1 // pred_region
      _
    $region17: #{tpu_custom_call.1} parent=1 // pred_fallthru
      _
    // Predicated region
    $region18: #{tpu_custom_call.1} parent=1 // pred_check
      _
    $region19: #{tpu_custom_call.1} parent=1 // pred_check_branch
      %51 = sbr.rel (0) target = $region21
    $region20: #{tpu_custom_call.1} parent=1 // pred_region
      _
    $region21: #{tpu_custom_call.1} parent=1 // pred_fallthru
      _
    // Predicated region
    $region22: #{tpu_custom_call.1} parent=1 // pred_check
      _
    $region23: #{tpu_custom_call.1} parent=1 // pred_check_branch
      %53 = sbr.rel (0) target = $region25
    $region24: #{tpu_custom_call.1} parent=1 // pred_region
      _
    $region25: #{tpu_custom_call.1} parent=1 // pred_fallthru
      _
    // Predicated region
    $region26: #{tpu_custom_call.1} parent=1 // pred_check
      _
    $region27: #{tpu_custom_call.1} parent=1 // pred_check_branch
      %55 = sbr.rel (0) target = $region29
    $region28: #{tpu_custom_call.1} parent=1 // pred_region
      _
    $region29: #{tpu_custom_call.1} parent=1 // pred_fallthru
      _
    // Predicated region
    $region30: #{tpu_custom_call.1} parent=1 // pred_check
      _
    $region31: #{tpu_custom_call.1} parent=1 // pred_check_branch
      %57 = sbr.rel (0) target = $region33
    $region32: #{tpu_custom_call.1} parent=1 // pred_region
      _
    $region33: #{tpu_custom_call.1} parent=1 // pred_fallthru
      _
    // Predicated region
    $region34: #{tpu_custom_call.1} parent=1 // pred_check
      _
    $region35: #{tpu_custom_call.1} parent=1 // pred_check_branch
      %59 = sbr.rel (0) target = $region37
    $region36: #{tpu_custom_call.1} parent=1 // pred_region
      %60 = dma.done [#allocation4], 128
    $region37: #{tpu_custom_call.1} parent=1 // pred_fallthru
      _
    // Predicated region
    $region38: #{tpu_custom_call.1} parent=1 // pred_check
      _
    $region39: #{tpu_custom_call.1} parent=1 // pred_check_branch
      %62 = sbr.rel (0) target = $region41
    $region40: #{tpu_custom_call.1} parent=1 // pred_region
      %63 = dma.done [#allocation6], 128
    $region41: #{tpu_custom_call.1} parent=1 // pred_fallthru
      _
    // Predicated region
    $region42: #{tpu_custom_call.1} parent=1 // pred_check
      _
    $region43: #{tpu_custom_call.1} parent=1 // pred_check_branch
      %65 = sbr.rel (0) target = $region45
    $region44: #{tpu_custom_call.1} parent=1 // pred_region
      %66 = dma.done [#allocation6], 128
    $region45: #{tpu_custom_call.1} parent=1 // pred_fallthru
      _
    %v68 = vld [vmem:[#allocation3] sm:$0xff]
    %v69 = vld [vmem:[#allocation5] sm:$0xff]
    %71 = vrot.lane.b32.xlu0 %v69, 11
    %v72 = vpop.permute.xlu0 %71
    %vm74 = vcmask 89088
    %v75 = vsel %vm74, %v68, %v72
    %v76 = vpack.c.bf16 %v75, %v75
    %v77 = vld [vmem:[#allocation7] sm:$0xf]
    %v78 = vld [vmem:[#allocation7 + $0x4] sm:$0xf]
    %v79 = vld [vmem:[%s3] sm:$0x1]
    %v81 = vlaneseq
    %v82 = vshrl.u32 %v81, 7
    %v83 = vsub.s32 0, %v82
    %v84 = vrot.slane %v79, %v83
    %v88 = vunpack.c.l.b16 %v77
    %v89 = vunpack.c.l.b16 %v78
    %v90 = vpack.c.b16 %v89, %v88
    %vm92 = vcmask 130048
    %v94 = vsel %vm92, %v76, 0
    %96 = vmatprep.subr.bf16.mxu0 0
    %97 = vmatpush1.bf16.msra.mxu0 %v90
    %98 = vmatprep.subr.bf16.mxu0 0
    %99 = vmatpush1.bf16.msra.mxu0 0
    %100 = vmatprep.subr.bf16.mxu0 0
    %101 = vmatpush1.bf16.msra.mxu0 0
    %102 = vmatprep.subr.bf16.mxu0 0
    %103 = vmatpush1.bf16.msra.mxu0 0
    %104 = vmatprep.subr.bf16.mxu0 0
    %105 = vmatpush1.bf16.msra.mxu0 0
    %106 = vmatprep.subr.bf16.mxu0 0
    %107 = vmatpush1.bf16.msra.mxu0 0
    %108 = vmatprep.subr.bf16.mxu0 0
    %109 = vmatpush1.bf16.msra.mxu0 0
    %110 = vmatprep.subr.bf16.mxu0 0
    %111 = vmatpush1.bf16.msra.mxu0 0
    %112 = vmatprep.subr.bf16.mxu0 0
    %113 = vmatpush1.bf16.msra.mxu0 0
    %114 = vmatprep.subr.bf16.mxu0 0
    %115 = vmatpush1.bf16.msra.mxu0 0
    %116 = vmatprep.subr.bf16.mxu0 0
    %117 = vmatpush1.bf16.msra.mxu0 0
    %118 = vmatprep.subr.bf16.mxu0 0
    %119 = vmatpush1.bf16.msra.mxu0 0
    %120 = vmatprep.subr.bf16.mxu0 0
    %121 = vmatpush1.bf16.msra.mxu0 0
    %122 = vmatprep.subr.bf16.mxu0 0
    %123 = vmatpush1.bf16.msra.mxu0 0
    %124 = vmatprep.subr.bf16.mxu0 0
    %125 = vmatpush1.bf16.msra.mxu0 0
    %126 = vmatprep.subr.bf16.mxu0 0
    %127 = vmatpush1.bf16.msra.mxu0 0
    %128 = vmatprep.mubr.bf16.mxu0 0
    %129 = vmatmul.mubr.bf16.gmra.mrb[0].mxu0 %v94
    %v130 = vpop.f32.mrb[0].mxu0
    %v131 = vadd.f32 %v84, %v130
    %v132 = vpop.f32.mrb[0].mxu0
    %v133 = vpop.f32.mrb[0].mxu0
    %v134 = vpop.f32.mrb[0].mxu0
    %135 = vdwg.mxu0
    %v136 = vmax.f32 %v131, 0.0
    %v137 = vpack.c.bf16 %v136, %v136
    %v138 = vld [vmem:[%s4] sm:$0xf]
    %v139 = vld [vmem:[%s4 + $0x4] sm:$0xf]
    %v140 = vld [vmem:[%s4 + $0x8] sm:$0xf]
    %v141 = vld [vmem:[%s4 + $0xc] sm:$0xf]
    %v142 = vld [vmem:[%s5] sm:$0x1]
    %v144 = vlaneseq
    %v145 = vshrl.u32 %v144, 7
    %v146 = vsub.s32 0, %v145
    %v147 = vrot.slane %v142, %v146
    %v153 = vunpack.c.l.b16 %v138
    %v154 = vunpack.c.l.b16 %v139
    %v155 = vunpack.c.l.b16 %v140
    %v156 = vunpack.c.l.b16 %v141
    %v157 = vpack.c.b16 %v154, %v153
    %v158 = vpack.c.b16 %v156, %v155
    %vm161 = vcmask 261120
    %v163 = vsel %vm161, %v137, 0
    %165 = vmatprep.subr.bf16.mxu0 0
    %166 = vmatpush1.bf16.msra.mxu0 %v157
    %167 = vmatprep.subr.bf16.mxu0 0
    %168 = vmatpush1.bf16.msra.mxu0 %v158
    %169 = vmatprep.subr.bf16.mxu0 0
    %170 = vmatpush1.bf16.msra.mxu0 0
    %171 = vmatprep.subr.bf16.mxu0 0
    %172 = vmatpush1.bf16.msra.mxu0 0
    %173 = vmatprep.subr.bf16.mxu0 0
    %174 = vmatpush1.bf16.msra.mxu0 0
    %175 = vmatprep.subr.bf16.mxu0 0
    %176 = vmatpush1.bf16.msra.mxu0 0
    %177 = vmatprep.subr.bf16.mxu0 0
    %178 = vmatpush1.bf16.msra.mxu0 0
    %179 = vmatprep.subr.bf16.mxu0 0
    %180 = vmatpush1.bf16.msra.mxu0 0
    %181 = vmatprep.subr.bf16.mxu0 0
    %182 = vmatpush1.bf16.msra.mxu0 0
    %183 = vmatprep.subr.bf16.mxu0 0
    %184 = vmatpush1.bf16.msra.mxu0 0
    %185 = vmatprep.subr.bf16.mxu0 0
    %186 = vmatpush1.bf16.msra.mxu0 0
    %187 = vmatprep.subr.bf16.mxu0 0
    %188 = vmatpush1.bf16.msra.mxu0 0
    %189 = vmatprep.subr.bf16.mxu0 0
    %190 = vmatpush1.bf16.msra.mxu0 0
    %191 = vmatprep.subr.bf16.mxu0 0
    %192 = vmatpush1.bf16.msra.mxu0 0
    %193 = vmatprep.subr.bf16.mxu0 0
    %194 = vmatpush1.bf16.msra.mxu0 0
    %195 = vmatprep.subr.bf16.mxu0 0
    %196 = vmatpush1.bf16.msra.mxu0 0
    %197 = vmatprep.mubr.bf16.mxu0 0
    %198 = vmatmul.mubr.bf16.gmra.mrb[0].mxu0 %v163
    %v199 = vpop.f32.mrb[0].mxu0
    %v200 = vadd.f32 %v147, %v199
    %v201 = vpop.f32.mrb[0].mxu0
    %v202 = vpop.f32.mrb[0].mxu0
    %v203 = vpop.f32.mrb[0].mxu0
    %204 = vdwg.mxu0
    %v205 = vmax.f32 %v200, 0.0
    %v206 = vld [vmem:[%s6] sm:$0x1]
    %v208 = vlaneseq
    %v209 = vshrl.u32 %v208, 7
    %v210 = vsub.s32 0, %v209
    %v211 = vrot.slane %v206, %v210
    %v213 = vmul.f32 %v205, %v211
    %v214 = vsel %vm161, %v213, 0.0
    %215 = vadd.xlane.f32.xlu0 %v214
    %v216 = vpop.xlane.xlu0 %215
    %s217 = sld [smem:[#allocation2]]
    %v218 = vstv %s217
    %v219 = vadd.f32 %v216, %v218
    %vm220 = vcmask 7168
    %221 = vst.msk [vmem:[%s8] sm:$0xff] %vm220, %v219
    // Predicated region
    $region46: #{tpu_custom_call.1} parent=1 // pred_check
      _
    $region47: #{tpu_custom_call.1} parent=1 // pred_check_branch
      %223 = sbr.rel (0) target = $region49
    $region48: #{tpu_custom_call.1} parent=1 // pred_region
      _
    $region49: #{tpu_custom_call.1} parent=1 // pred_fallthru
      _
    // Predicated region
    $region50: #{tpu_custom_call.1} parent=1 // pred_check
      _
    $region51: #{tpu_custom_call.1} parent=1 // pred_check_branch
      %225 = sbr.rel (0) target = $region53
    $region52: #{tpu_custom_call.1} parent=1 // pred_region
      _
    $region53: #{tpu_custom_call.1} parent=1 // pred_fallthru
      _
    %226 = vsyncpa [#allocation4], 1
    %227 = vsyncpa [#allocation6], 1

// kernel: tpu_custom_call.1
$region0: #{tpu_custom_call.1}
  #allocation0 [shape = 'u32[]', space=smem, size = 0x4, offset = 0x4, fixed_abs, tag = 'smem constant byte address 0x4 - core index']
  #allocation1 [shape = 'u32[144,128]{1,0:T(1,128)}', space=vmem, size = 0x12000, scoped, tag = 'internal scratch']
  #allocation2 [shape = 'f32[1,1]{1,0:T(1,128)S(6)}', space=smem, size = 0x200, scoped, tag = 'scoped memory for tpu_custom_call.1']
  %s0 = inlined_call_operand.hbm [shape: f32[8,11], index: 0, kind: input, shape index: {}]
  %s1 = inlined_call_operand.hbm [shape: f32[8,5], index: 1, kind: input, shape index: {}]
  %s2 = inlined_call_operand.hbm [shape: bf16[11,32], index: 2, kind: input, shape index: {}]
  %s3 = inlined_call_operand.vmem [shape: bf16[5,32], index: 3, kind: input, shape index: {}]
  %s4 = inlined_call_operand.vmem [shape: f32[1,32], index: 4, kind: input, shape index: {}]
  %s5 = inlined_call_operand.vmem [shape: bf16[32,32], index: 5, kind: input, shape index: {}]
  %s6 = inlined_call_operand.vmem [shape: f32[1,32], index: 6, kind: input, shape index: {}]
  %s7 = inlined_call_operand.vmem [shape: f32[1,32], index: 7, kind: input, shape index: {}]
  %s8 = inlined_call_operand.<no memory space> [shape: f32[1,1], index: 8, kind: input, shape index: {}]
  %s9 = inlined_call_operand.vmem [shape: f32[8,1], index: 9, kind: output, shape index: {}]
  %s10 = sld [smem:[#allocation0]]
  $region58: #{tpu_custom_call.1} parent=0
    _
  %s12 = ssub.s32 1, %s10
  %s13 = scalar_select 0, %s12, %s10
  %14 = sst [smem:[#allocation2]] %s8
  $region1: #{tpu_custom_call.1} parent=0
    #allocation3 [shape = 'u8[4096]{0}', space=vmem, size = 0x1000, scoped, tag = 'input window, operand 0, single buffered']
    #allocation4 [shape = 's32[1]{0}', space=sflag, size = 0x4, scoped, tag = 'scoped memory for tpu_custom_call.1']
    #allocation5 [shape = 'u8[4096]{0}', space=vmem, size = 0x1000, scoped, tag = 'input window, operand 1, single buffered']
    #allocation6 [shape = 's32[1]{0}', space=sflag, size = 0x4, scoped, tag = 'scoped memory for tpu_custom_call.1']
    #allocation7 [shape = 'u8[4096]{0}', space=vmem, size = 0x1000, scoped, tag = 'input window, operand 2, single buffered']
    %15 = vsyncpa [#allocation4], 0
    %16 = vsyncpa [#allocation6], 0
    // Predicated region
    $region2: #{tpu_custom_call.1} parent=1 // pred_check
      _
    $region3: #{tpu_custom_call.1} parent=1 // pred_check_branch
      %18 = sbr.rel (0) target = $region5
    $region4: #{tpu_custom_call.1} parent=1 // pred_region
      %s20 = ssub.s32 128, 128
      %21 = vsyncadd [#allocation4], %s20
      %s23 = sshll.u32 [#allocation3], 4
      %s24 = int_to_ptr.vmem [resolvable:$true] %s23
      %26 = dma.hbm_to_vmem [thread:$0]  %s0, 128, %s24, [#allocation4]
    $region5: #{tpu_custom_call.1} parent=1 // pred_fallthru
      _
    // Predicated region
    $region6: #{tpu_custom_call.1} parent=1 // pred_check
      _
    $region7: #{tpu_custom_call.1} parent=1 // pred_check_branch
      %28 = sbr.rel (0) target = $region9
    $region8: #{tpu_custom_call.1} parent=1 // pred_region
      %s30 = ssub.s32 128, 128
      %31 = vsyncadd [#allocation6], %s30
      %s33 = sshll.u32 [#allocation5], 4
      %s34 = int_to_ptr.vmem [resolvable:$true] %s33
      %36 = dma.hbm_to_vmem [thread:$0]  %s1, 128, %s34, [#allocation6]
    $region9: #{tpu_custom_call.1} parent=1 // pred_fallthru
      _
    // Predicated region
    $region10: #{tpu_custom_call.1} parent=1 // pred_check
      _
    $region11: #{tpu_custom_call.1} parent=1 // pred_check_branch
      %38 = sbr.rel (0) target = $region13
    $region12: #{tpu_custom_call.1} parent=1 // pred_region
      %s40 = ssub.s32 128, 128
      %41 = vsyncadd [#allocation6], %s40
      %s42 = sshll.u32 [#allocation7], 4
      %s43 = int_to_ptr.vmem [resolvable:$true] %s42
      %48 = dma.hbm_to_vmem [thread:$0]  %s2, 128, %s43, [#allocation6], 64, 64, 4
    $region13: #{tpu_custom_call.1} parent=1 // pred_fallthru
      _
    // Predicated region
    $region14: #{tpu_custom_call.1} parent=1 // pred_check
      _
    $region15: #{tpu_custom_call.1} parent=1 // pred_check_branch
      %50 = sbr.rel (0) target = $region17
    $region16: #{tpu_custom_call.1} parent=1 // pred_region
      _
    $region17: #{tpu_custom_call.1} parent=1 // pred_fallthru
      _
    // Predicated region
    $region18: #{tpu_custom_call.1} parent=1 // pred_check
      _
    $region19: #{tpu_custom_call.1} parent=1 // pred_check_branch
      %52 = sbr.rel (0) target = $region21
    $region20: #{tpu_custom_call.1} parent=1 // pred_region
      _
    $region21: #{tpu_custom_call.1} parent=1 // pred_fallthru
      _
    // Predicated region
    $region22: #{tpu_custom_call.1} parent=1 // pred_check
      _
    $region23: #{tpu_custom_call.1} parent=1 // pred_check_branch
      %54 = sbr.rel (0) target = $region25
    $region24: #{tpu_custom_call.1} parent=1 // pred_region
      _
    $region25: #{tpu_custom_call.1} parent=1 // pred_fallthru
      _
    // Predicated region
    $region26: #{tpu_custom_call.1} parent=1 // pred_check
      _
    $region27: #{tpu_custom_call.1} parent=1 // pred_check_branch
      %56 = sbr.rel (0) target = $region29
    $region28: #{tpu_custom_call.1} parent=1 // pred_region
      _
    $region29: #{tpu_custom_call.1} parent=1 // pred_fallthru
      _
    // Predicated region
    $region30: #{tpu_custom_call.1} parent=1 // pred_check
      _
    $region31: #{tpu_custom_call.1} parent=1 // pred_check_branch
      %58 = sbr.rel (0) target = $region33
    $region32: #{tpu_custom_call.1} parent=1 // pred_region
      _
    $region33: #{tpu_custom_call.1} parent=1 // pred_fallthru
      _
    // Predicated region
    $region34: #{tpu_custom_call.1} parent=1 // pred_check
      _
    $region35: #{tpu_custom_call.1} parent=1 // pred_check_branch
      %60 = sbr.rel (0) target = $region37
    $region36: #{tpu_custom_call.1} parent=1 // pred_region
      _
    $region37: #{tpu_custom_call.1} parent=1 // pred_fallthru
      _
    // Predicated region
    $region38: #{tpu_custom_call.1} parent=1 // pred_check
      _
    $region39: #{tpu_custom_call.1} parent=1 // pred_check_branch
      %62 = sbr.rel (0) target = $region41
    $region40: #{tpu_custom_call.1} parent=1 // pred_region
      %63 = dma.done [#allocation4], 128
    $region41: #{tpu_custom_call.1} parent=1 // pred_fallthru
      _
    // Predicated region
    $region42: #{tpu_custom_call.1} parent=1 // pred_check
      _
    $region43: #{tpu_custom_call.1} parent=1 // pred_check_branch
      %65 = sbr.rel (0) target = $region45
    $region44: #{tpu_custom_call.1} parent=1 // pred_region
      %66 = dma.done [#allocation6], 128
    $region45: #{tpu_custom_call.1} parent=1 // pred_fallthru
      _
    // Predicated region
    $region46: #{tpu_custom_call.1} parent=1 // pred_check
      _
    $region47: #{tpu_custom_call.1} parent=1 // pred_check_branch
      %68 = sbr.rel (0) target = $region49
    $region48: #{tpu_custom_call.1} parent=1 // pred_region
      %69 = dma.done [#allocation6], 128
    $region49: #{tpu_custom_call.1} parent=1 // pred_fallthru
      _
    %v71 = vld [vmem:[#allocation3] sm:$0xff]
    %v72 = vpack.c.bf16 %v71, %v71
    %v73 = vld [vmem:[#allocation7] sm:$0xf]
    %v74 = vld [vmem:[#allocation7 + $0x4] sm:$0x3]
    %v75 = vld [vmem:[#allocation5] sm:$0xff]
    %v76 = vpack.c.bf16 %v75, %v75
    %v77 = vld [vmem:[%s3] sm:$0x7]
    %vm78 = vcmask 39936
    %v80 = vsel %vm78, %v76, 0
    %vm82 = vcmask 1041408
    %vm83 = vcmask 1042432
    %v84 = vsel %vm82, 4294967295, 65535
    %v85 = vsel %vm83, %v84, 0
    %v87 = vand.u32 %v77, %v85
    %89 = vmatprep.subr.bf16.mxu0 0
    %90 = vmatpush1.bf16.msra.mxu0 %v87
    %91 = vmatprep.subr.bf16.mxu0 0
    %92 = vmatpush1.bf16.msra.mxu0 0
    %93 = vmatprep.subr.bf16.mxu0 0
    %94 = vmatpush1.bf16.msra.mxu0 0
    %95 = vmatprep.subr.bf16.mxu0 0
    %96 = vmatpush1.bf16.msra.mxu0 0
    %97 = vmatprep.subr.bf16.mxu0 0
    %98 = vmatpush1.bf16.msra.mxu0 0
    %99 = vmatprep.subr.bf16.mxu0 0
    %100 = vmatpush1.bf16.msra.mxu0 0
    %101 = vmatprep.subr.bf16.mxu0 0
    %102 = vmatpush1.bf16.msra.mxu0 0
    %103 = vmatprep.subr.bf16.mxu0 0
    %104 = vmatpush1.bf16.msra.mxu0 0
    %105 = vmatprep.subr.bf16.mxu0 0
    %106 = vmatpush1.bf16.msra.mxu0 0
    %107 = vmatprep.subr.bf16.mxu0 0
    %108 = vmatpush1.bf16.msra.mxu0 0
    %109 = vmatprep.subr.bf16.mxu0 0
    %110 = vmatpush1.bf16.msra.mxu0 0
    %111 = vmatprep.subr.bf16.mxu0 0
    %112 = vmatpush1.bf16.msra.mxu0 0
    %113 = vmatprep.subr.bf16.mxu0 0
    %114 = vmatpush1.bf16.msra.mxu0 0
    %115 = vmatprep.subr.bf16.mxu0 0
    %116 = vmatpush1.bf16.msra.mxu0 0
    %117 = vmatprep.subr.bf16.mxu0 0
    %118 = vmatpush1.bf16.msra.mxu0 0
    %119 = vmatprep.subr.bf16.mxu0 0
    %120 = vmatpush1.bf16.msra.mxu0 0
    %121 = vmatprep.mubr.bf16.mxu0 0
    %122 = vmatmul.mubr.bf16.gmra.mrb[0].mxu0 %v80
    %v123 = vpop.f32.mrb[0].mxu0
    %v124 = vadd.f32 0.0, %v123
    %v125 = vpop.f32.mrb[0].mxu0
    %v126 = vpop.f32.mrb[0].mxu0
    %v127 = vpop.f32.mrb[0].mxu0
    %128 = vdwg.mxu0
    %v131 = vunpack.c.l.b16 %v73
    %v132 = vunpack.c.l.b16 %v74
    %v133 = vpack.c.b16 %v132, %v131
    %vm134 = vcmask 89088
    %v136 = vsel %vm134, %v72, 0
    %vm138 = vcmask 1044480
    %vm139 = vcmask 1045504
    %v140 = vsel %vm138, 4294967295, 65535
    %v141 = vsel %vm139, %v140, 0
    %v143 = vand.u32 %v133, %v141
    %145 = vmatprep.subr.bf16.mxu0 0
    %146 = vmatpush1.bf16.msra.mxu0 %v143
    %147 = vmatprep.subr.bf16.mxu0 0
    %148 = vmatpush1.bf16.msra.mxu0 0
    %149 = vmatprep.subr.bf16.mxu0 0
    %150 = vmatpush1.bf16.msra.mxu0 0
    %151 = vmatprep.subr.bf16.mxu0 0
    %152 = vmatpush1.bf16.msra.mxu0 0
    %153 = vmatprep.subr.bf16.mxu0 0
    %154 = vmatpush1.bf16.msra.mxu0 0
    %155 = vmatprep.subr.bf16.mxu0 0
    %156 = vmatpush1.bf16.msra.mxu0 0
    %157 = vmatprep.subr.bf16.mxu0 0
    %158 = vmatpush1.bf16.msra.mxu0 0
    %159 = vmatprep.subr.bf16.mxu0 0
    %160 = vmatpush1.bf16.msra.mxu0 0
    %161 = vmatprep.subr.bf16.mxu0 0
    %162 = vmatpush1.bf16.msra.mxu0 0
    %163 = vmatprep.subr.bf16.mxu0 0
    %164 = vmatpush1.bf16.msra.mxu0 0
    %165 = vmatprep.subr.bf16.mxu0 0
    %166 = vmatpush1.bf16.msra.mxu0 0
    %167 = vmatprep.subr.bf16.mxu0 0
    %168 = vmatpush1.bf16.msra.mxu0 0
    %169 = vmatprep.subr.bf16.mxu0 0
    %170 = vmatpush1.bf16.msra.mxu0 0
    %171 = vmatprep.subr.bf16.mxu0 0
    %172 = vmatpush1.bf16.msra.mxu0 0
    %173 = vmatprep.subr.bf16.mxu0 0
    %174 = vmatpush1.bf16.msra.mxu0 0
    %175 = vmatprep.subr.bf16.mxu0 0
    %176 = vmatpush1.bf16.msra.mxu0 0
    %177 = vmatprep.mubr.bf16.mxu0 0
    %178 = vmatmul.mubr.bf16.gmra.mrb[0].mxu0 %v136
    %v179 = vpop.f32.mrb[0].mxu0
    %v180 = vadd.f32 %v124, %v179
    %v181 = vpop.f32.mrb[0].mxu0
    %v182 = vpop.f32.mrb[0].mxu0
    %v183 = vpop.f32.mrb[0].mxu0
    %184 = vdwg.mxu0
    %v185 = vld [vmem:[%s4] sm:$0x1]
    %v187 = vlaneseq
    %v188 = vshrl.u32 %v187, 7
    %v189 = vsub.s32 0, %v188
    %v190 = vrot.slane %v185, %v189
    %v192 = vadd.f32 %v180, %v190
    %v193 = vmax.f32 %v192, 0.0
    %v194 = vpack.c.bf16 %v193, %v193
    %v195 = vld [vmem:[%s5] sm:$0xf]
    %v196 = vld [vmem:[%s5 + $0x4] sm:$0xf]
    %v197 = vld [vmem:[%s5 + $0x8] sm:$0xf]
    %v198 = vld [vmem:[%s5 + $0xc] sm:$0xf]
    %v199 = vld [vmem:[%s6] sm:$0x1]
    %v201 = vlaneseq
    %v202 = vshrl.u32 %v201, 7
    %v203 = vsub.s32 0, %v202
    %v204 = vrot.slane %v199, %v203
    %v210 = vunpack.c.l.b16 %v195
    %v211 = vunpack.c.l.b16 %v196
    %v212 = vunpack.c.l.b16 %v197
    %v213 = vunpack.c.l.b16 %v198
    %v214 = vpack.c.b16 %v211, %v210
    %v215 = vpack.c.b16 %v213, %v212
    %vm218 = vcmask 261120
    %v220 = vsel %vm218, %v194, 0
    %222 = vmatprep.subr.bf16.mxu0 0
    %223 = vmatpush1.bf16.msra.mxu0 %v214
    %224 = vmatprep.subr.bf16.mxu0 0
    %225 = vmatpush1.bf16.msra.mxu0 %v215
    %226 = vmatprep.subr.bf16.mxu0 0
    %227 = vmatpush1.bf16.msra.mxu0 0
    %228 = vmatprep.subr.bf16.mxu0 0
    %229 = vmatpush1.bf16.msra.mxu0 0
    %230 = vmatprep.subr.bf16.mxu0 0
    %231 = vmatpush1.bf16.msra.mxu0 0
    %232 = vmatprep.subr.bf16.mxu0 0
    %233 = vmatpush1.bf16.msra.mxu0 0
    %234 = vmatprep.subr.bf16.mxu0 0
    %235 = vmatpush1.bf16.msra.mxu0 0
    %236 = vmatprep.subr.bf16.mxu0 0
    %237 = vmatpush1.bf16.msra.mxu0 0
    %238 = vmatprep.subr.bf16.mxu0 0
    %239 = vmatpush1.bf16.msra.mxu0 0
    %240 = vmatprep.subr.bf16.mxu0 0
    %241 = vmatpush1.bf16.msra.mxu0 0
    %242 = vmatprep.subr.bf16.mxu0 0
    %243 = vmatpush1.bf16.msra.mxu0 0
    %244 = vmatprep.subr.bf16.mxu0 0
    %245 = vmatpush1.bf16.msra.mxu0 0
    %246 = vmatprep.subr.bf16.mxu0 0
    %247 = vmatpush1.bf16.msra.mxu0 0
    %248 = vmatprep.subr.bf16.mxu0 0
    %249 = vmatpush1.bf16.msra.mxu0 0
    %250 = vmatprep.subr.bf16.mxu0 0
    %251 = vmatpush1.bf16.msra.mxu0 0
    %252 = vmatprep.subr.bf16.mxu0 0
    %253 = vmatpush1.bf16.msra.mxu0 0
    %254 = vmatprep.mubr.bf16.mxu0 0
    %255 = vmatmul.mubr.bf16.gmra.mrb[0].mxu0 %v220
    %v256 = vpop.f32.mrb[0].mxu0
    %v257 = vadd.f32 %v204, %v256
    %v258 = vpop.f32.mrb[0].mxu0
    %v259 = vpop.f32.mrb[0].mxu0
    %v260 = vpop.f32.mrb[0].mxu0
    %261 = vdwg.mxu0
    %v262 = vmax.f32 %v257, 0.0
    %v263 = vld [vmem:[%s7] sm:$0x1]
    %v265 = vlaneseq
    %v266 = vshrl.u32 %v265, 7
    %v267 = vsub.s32 0, %v266
    %v268 = vrot.slane %v263, %v267
    %v270 = vmul.f32 %v262, %v268
    %v271 = vsel %vm218, %v270, 0.0
    %272 = vadd.xlane.f32.xlu0 %v271
    %v273 = vpop.xlane.xlu0 %272
    %s274 = sld [smem:[#allocation2]]
    %v275 = vstv %s274
    %v276 = vadd.f32 %v273, %v275
    %vm277 = vcmask 7168
    %278 = vst.msk [vmem:[%s9] sm:$0xff] %vm277, %v276
    // Predicated region
    $region50: #{tpu_custom_call.1} parent=1 // pred_check
      _
    $region51: #{tpu_custom_call.1} parent=1 // pred_check_branch
      %280 = sbr.rel (0) target = $region53
    $region52: #{tpu_custom_call.1} parent=1 // pred_region
      _
    $region53: #{tpu_custom_call.1} parent=1 // pred_fallthru
      _
    // Predicated region
    $region54: #{tpu_custom_call.1} parent=1 // pred_check
      _
    $region55: #{tpu_custom_call.1} parent=1 // pred_check_branch
      %282 = sbr.rel (0) target = $region57
    $region56: #{tpu_custom_call.1} parent=1 // pred_region
      _
    $region57: #{tpu_custom_call.1} parent=1 // pred_fallthru
      _
    %283 = vsyncpa [#allocation4], 1
    %284 = vsyncpa [#allocation6], 1

</llo_original>
